<compile_context>
chip_gen: v5e
topology: v5e:2x2
jax: 0.10.0
libtpu: 0.0.40
codegen_flags: <defaults>
</compile_context>

<pallas_src>
import jax
import jax.numpy as jnp
from jax.experimental import pallas as pl
from jax.experimental.pallas import tpu as pltpu


HIDDEN = 100        # logical hidden size from MLP.__init__
HIDDEN_PAD = 128    # lane / MXU aligned hidden width
OUT_PAD = 128       # lane-dense output slab; only column 0 is real


def _soft_q_kernel(s_ref, a_ref, w1s_ref, w1a_ref, b1_ref,
                   w2_ref, b2_ref, w3_ref, b3_ref, out_ref):
    """One batch tile of the 3-layer MLP. All matmuls hit the MXU with f32 acc."""
    # fc1: concat([state, action]) @ W1 == state @ W1s + action @ W1a
    h1 = jnp.dot(s_ref[...], w1s_ref[...], preferred_element_type=jnp.float32)
    h1 = h1 + jnp.dot(a_ref[...], w1a_ref[...], preferred_element_type=jnp.float32)
    h1 = jnp.maximum(h1 + b1_ref[...], 0.0)                                   # ReLU (VPU)
    # fc2
    h2 = jnp.dot(h1, w2_ref[...], preferred_element_type=jnp.float32)
    h2 = jnp.maximum(h2 + b2_ref[...], 0.0)                                   # ReLU (VPU)
    # classifier (padded to 128 output lanes -> unmasked, lane-dense store)
    out = jnp.dot(h2, w3_ref[...], preferred_element_type=jnp.float32) + b3_ref[...]
    out_ref[...] = out.astype(out_ref.dtype)


def soft_q_forward(state, action, params, *, block_b=256):
    """JAX wrapper: batch padding + grid over batch tiles; returns (B, 1)."""
    w1s, w1a, b1, w2, b2, w3, b3 = params
    B, sd = state.shape
    _, ad = action.shape

    state = state.astype(jnp.float32)
    action = action.astype(jnp.float32)

    # Batch tile: sublane-aligned (>= 8), capped at block_b rows.
    tb = min(block_b, max(8, pl.next_power_of_2(B)))
    b_pad = pl.cdiv(B, tb) * tb
    if b_pad != B:
        state = jnp.pad(state, ((0, b_pad - B), (0, 0)))
        action = jnp.pad(action, ((0, b_pad - B), (0, 0)))

    grid = (b_pad // tb,)

    def batch_map(i):
        return (i, 0)

    def const_map(i):
        return (0, 0)

    in_specs = [
        pl.BlockSpec((tb, sd), batch_map),        # state tile   (streamed)
        pl.BlockSpec((tb, ad), batch_map),        # action tile  (streamed)
        pl.BlockSpec(w1s.shape, const_map),       # weights/biases resident
        pl.BlockSpec(w1a.shape, const_map),
        pl.BlockSpec(b1.shape, const_map),
        pl.BlockSpec(w2.shape, const_map),
        pl.BlockSpec(b2.shape, const_map),
        pl.BlockSpec(w3.shape, const_map),
        pl.BlockSpec(b3.shape, const_map),
    ]
    out_spec = pl.BlockSpec((tb, OUT_PAD), batch_map)

    flops = 2 * b_pad * (sd * HIDDEN_PAD + ad * HIDDEN_PAD
                         + HIDDEN_PAD * HIDDEN_PAD + HIDDEN_PAD * OUT_PAD)
    bytes_accessed = 4 * (state.size + action.size + w1s.size + w1a.size + b1.size
                          + w2.size + b2.size + w3.size + b3.size + b_pad * OUT_PAD)

    out = pl.pallas_call(
        _soft_q_kernel,
        out_shape=jax.ShapeDtypeStruct((b_pad, OUT_PAD), jnp.float32),
        grid=grid,
        in_specs=in_specs,
        out_specs=out_spec,
        compiler_params=pltpu.CompilerParams(
            dimension_semantics=("parallel",)),
        cost_estimate=pl.CostEstimate(
            flops=flops, transcendentals=0, bytes_accessed=bytes_accessed),
    )(state, action, w1s, w1a, b1, w2, b2, w3, b3)

    # Strip batch padding and the 127 padded output lanes.
    return out[:B, :1]


def init_params(key, input_dim, output_dim):
    """Xavier-normal weights / zero biases (cf. Backbone._init_weights).

    Weights are stored transposed vs torch.nn.Linear ((in, out)), with W1 split
    into state / action halves and every dim zero-padded to lane/MXU aligned
    sizes. Zero padding is numerically exact (padded hidden units are relu(0)=0).
    """
    din = input_dim + output_dim
    k1, k2, k3 = jax.random.split(key, 3)

    def xavier(k, fan_in, fan_out):
        std = (2.0 / (fan_in + fan_out)) ** 0.5
        return std * jax.random.normal(k, (fan_in, fan_out), dtype=jnp.float32)

    w1 = xavier(k1, din, HIDDEN)
    w2 = xavier(k2, HIDDEN, HIDDEN)
    w3 = xavier(k3, HIDDEN, 1)

    w1s = jnp.pad(w1[:input_dim], ((0, 0), (0, HIDDEN_PAD - HIDDEN)))
    w1a = jnp.pad(w1[input_dim:], ((0, 0), (0, HIDDEN_PAD - HIDDEN)))
    b1 = jnp.zeros((1, HIDDEN_PAD), jnp.float32)
    w2p = jnp.pad(w2, ((0, HIDDEN_PAD - HIDDEN), (0, HIDDEN_PAD - HIDDEN)))
    b2 = jnp.zeros((1, HIDDEN_PAD), jnp.float32)
    w3p = jnp.pad(w3, ((0, HIDDEN_PAD - HIDDEN), (0, OUT_PAD - 1)))
    b3 = jnp.zeros((1, OUT_PAD), jnp.float32)
    return (w1s, w1a, b1, w2p, b2, w3p, b3)


def reference_forward(state, action, params):
    """Pure-JAX reference (same padded params; padding is exact)."""
    w1s, w1a, b1, w2, b2, w3, b3 = params
    h1 = jnp.maximum(state @ w1s + action @ w1a + b1, 0.0)
    h2 = jnp.maximum(h1 @ w2 + b2, 0.0)
    return (h2 @ w3 + b3)[:, :1]


if __name__ == "__main__":
    # Small shapes consistent with the module: state dim = 16, action dim = 4.
    batch, state_dim, action_dim = 2, 16, 4

    key = jax.random.PRNGKey(0)
    k_state, k_action, k_params = jax.random.split(key, 3)

    state = jax.random.normal(k_state, (batch, state_dim), dtype=jnp.float32)
    action = jax.random.normal(k_action, (batch, action_dim), dtype=jnp.float32)
    params = init_params(k_params, state_dim, action_dim)

    out = soft_q_forward(state, action, params)
    out = jax.block_until_ready(out)

    ref = reference_forward(state, action, params)
    assert out.shape == (batch, 1), out.shape
    assert jnp.allclose(out, ref, atol=1e-4, rtol=1e-4), (out, ref)

    print("KERNEL_OK")
</pallas_src>

<mosaic_0001>
module attributes {stable_mosaic.version = 11 : i64} {
  func.func @_soft_q_kernel(%arg0: i32, %arg1: memref<8x16xf32, #tpu.memory_space<vmem>>, %arg2: memref<8x4xf32, #tpu.memory_space<vmem>>, %arg3: memref<16x128xf32, #tpu.memory_space<vmem>>, %arg4: memref<4x128xf32, #tpu.memory_space<vmem>>, %arg5: memref<1x128xf32, #tpu.memory_space<vmem>>, %arg6: memref<128x128xf32, #tpu.memory_space<vmem>>, %arg7: memref<1x128xf32, #tpu.memory_space<vmem>>, %arg8: memref<128x128xf32, #tpu.memory_space<vmem>>, %arg9: memref<1x128xf32, #tpu.memory_space<vmem>>, %arg10: memref<8x128xf32, #tpu.memory_space<vmem>>) attributes {dimension_semantics = [#tpu.dimension_semantics<parallel>], iteration_bounds = array<i64: 1>, scalar_prefetch = 0 : i64, scratch_operands = 0 : i64, tpu.core_type = #tpu.core_type<tc>, window_params = [{transform_indices = @transform_0, window_bounds = array<i64: 8, 16>}, {transform_indices = @transform_1, window_bounds = array<i64: 8, 4>}, {pipeline_mode = #tpu.pipeline_mode<synchronous>, transform_indices = @transform_2, window_bounds = array<i64: 16, 128>}, {pipeline_mode = #tpu.pipeline_mode<synchronous>, transform_indices = @transform_3, window_bounds = array<i64: 4, 128>}, {pipeline_mode = #tpu.pipeline_mode<synchronous>, transform_indices = @transform_4, window_bounds = array<i64: 1, 128>}, {pipeline_mode = #tpu.pipeline_mode<synchronous>, transform_indices = @transform_5, window_bounds = array<i64: 128, 128>}, {pipeline_mode = #tpu.pipeline_mode<synchronous>, transform_indices = @transform_6, window_bounds = array<i64: 1, 128>}, {pipeline_mode = #tpu.pipeline_mode<synchronous>, transform_indices = @transform_7, window_bounds = array<i64: 128, 128>}, {pipeline_mode = #tpu.pipeline_mode<synchronous>, transform_indices = @transform_8, window_bounds = array<i64: 1, 128>}, {transform_indices = @transform_9, window_bounds = array<i64: 8, 128>}]} {
    %c0 = arith.constant 0 : index
    %c0_0 = arith.constant 0 : index
    %0 = vector.load %arg1[%c0, %c0_0] : memref<8x16xf32, #tpu.memory_space<vmem>>, vector<8x16xf32>
    %c0_1 = arith.constant 0 : index
    %c0_2 = arith.constant 0 : index
    %1 = vector.load %arg3[%c0_1, %c0_2] : memref<16x128xf32, #tpu.memory_space<vmem>>, vector<16x128xf32>
    %cst = arith.constant dense<0.000000e+00> : vector<8x128xf32>
    %2 = tpu.matmul %0, %1, %cst {dimension_numbers = #tpu.dot_dimension_numbers<[1], [0], [0], [1], [0, 0, 1, 1], [], []>} : vector<8x16xf32>, vector<16x128xf32>, vector<8x128xf32> -> vector<8x128xf32>
    %c0_3 = arith.constant 0 : index
    %c0_4 = arith.constant 0 : index
    %3 = vector.load %arg2[%c0_3, %c0_4] : memref<8x4xf32, #tpu.memory_space<vmem>>, vector<8x4xf32>
    %c0_5 = arith.constant 0 : index
    %c0_6 = arith.constant 0 : index
    %4 = vector.load %arg4[%c0_5, %c0_6] : memref<4x128xf32, #tpu.memory_space<vmem>>, vector<4x128xf32>
    %cst_7 = arith.constant dense<0.000000e+00> : vector<8x128xf32>
    %5 = tpu.matmul %3, %4, %cst_7 {dimension_numbers = #tpu.dot_dimension_numbers<[1], [0], [0], [1], [0, 0, 1, 1], [], []>} : vector<8x4xf32>, vector<4x128xf32>, vector<8x128xf32> -> vector<8x128xf32>
    %6 = arith.addf %2, %5 : vector<8x128xf32>
    %c0_8 = arith.constant 0 : index
    %c0_9 = arith.constant 0 : index
    %7 = vector.load %arg5[%c0_8, %c0_9] : memref<1x128xf32, #tpu.memory_space<vmem>>, vector<1x128xf32>
    %8 = vector.broadcast %7 : vector<1x128xf32> to vector<8x128xf32>
    %9 = arith.addf %6, %8 : vector<8x128xf32>
    %cst_10 = arith.constant 0.000000e+00 : f32
    %10 = vector.broadcast %cst_10 : f32 to vector<8x128xf32>
    %11 = arith.maximumf %9, %10 : vector<8x128xf32>
    %c0_11 = arith.constant 0 : index
    %c0_12 = arith.constant 0 : index
    %12 = vector.load %arg6[%c0_11, %c0_12] : memref<128x128xf32, #tpu.memory_space<vmem>>, vector<128x128xf32>
    %cst_13 = arith.constant dense<0.000000e+00> : vector<8x128xf32>
    %13 = tpu.matmul %11, %12, %cst_13 {dimension_numbers = #tpu.dot_dimension_numbers<[1], [0], [0], [1], [0, 0, 1, 1], [], []>} : vector<8x128xf32>, vector<128x128xf32>, vector<8x128xf32> -> vector<8x128xf32>
    %c0_14 = arith.constant 0 : index
    %c0_15 = arith.constant 0 : index
    %14 = vector.load %arg7[%c0_14, %c0_15] : memref<1x128xf32, #tpu.memory_space<vmem>>, vector<1x128xf32>
    %15 = vector.broadcast %14 : vector<1x128xf32> to vector<8x128xf32>
    %16 = arith.addf %13, %15 : vector<8x128xf32>
    %cst_16 = arith.constant 0.000000e+00 : f32
    %17 = vector.broadcast %cst_16 : f32 to vector<8x128xf32>
    %18 = arith.maximumf %16, %17 : vector<8x128xf32>
    %c0_17 = arith.constant 0 : index
    %c0_18 = arith.constant 0 : index
    %19 = vector.load %arg8[%c0_17, %c0_18] : memref<128x128xf32, #tpu.memory_space<vmem>>, vector<128x128xf32>
    %cst_19 = arith.constant dense<0.000000e+00> : vector<8x128xf32>
    %20 = tpu.matmul %18, %19, %cst_19 {dimension_numbers = #tpu.dot_dimension_numbers<[1], [0], [0], [1], [0, 0, 1, 1], [], []>} : vector<8x128xf32>, vector<128x128xf32>, vector<8x128xf32> -> vector<8x128xf32>
    %c0_20 = arith.constant 0 : index
    %c0_21 = arith.constant 0 : index
    %21 = vector.load %arg9[%c0_20, %c0_21] : memref<1x128xf32, #tpu.memory_space<vmem>>, vector<1x128xf32>
    %22 = vector.broadcast %21 : vector<1x128xf32> to vector<8x128xf32>
    %23 = arith.addf %20, %22 : vector<8x128xf32>
    %c0_22 = arith.constant 0 : index
    %c0_23 = arith.constant 0 : index
    %24 = vector.load %arg10[%c0_22, %c0_23] : memref<8x128xf32, #tpu.memory_space<vmem>>, vector<8x128xf32>
    tpu.vector_store %arg10[%c0_22, %c0_23], %23 {strides = array<i32>} : memref<8x128xf32, #tpu.memory_space<vmem>>, vector<8x128xf32>,
    return
  }
  func.func @transform_0(%arg0: i32) -> (i32, i32) {
    %c0_i32 = arith.constant 0 : i32
    %c0_i32_0 = arith.constant 0 : i32
    return %arg0, %c0_i32 : i32, i32
  }
  func.func @transform_1(%arg0: i32) -> (i32, i32) {
    %c0_i32 = arith.constant 0 : i32
    %c0_i32_0 = arith.constant 0 : i32
    return %arg0, %c0_i32 : i32, i32
  }
  func.func @transform_2(%arg0: i32) -> (i32, i32) {
    %c0_i32 = arith.constant 0 : i32
    %c0_i32_0 = arith.constant 0 : i32
    %c0_i32_1 = arith.constant 0 : i32
    return %c0_i32, %c0_i32_0 : i32, i32
  }
  func.func @transform_3(%arg0: i32) -> (i32, i32) {
    %c0_i32 = arith.constant 0 : i32
    %c0_i32_0 = arith.constant 0 : i32
    %c0_i32_1 = arith.constant 0 : i32
    return %c0_i32, %c0_i32_0 : i32, i32
  }
  func.func @transform_4(%arg0: i32) -> (i32, i32) {
    %c0_i32 = arith.constant 0 : i32
    %c0_i32_0 = arith.constant 0 : i32
    %c0_i32_1 = arith.constant 0 : i32
    return %c0_i32, %c0_i32_0 : i32, i32
  }
  func.func @transform_5(%arg0: i32) -> (i32, i32) {
    %c0_i32 = arith.constant 0 : i32
    %c0_i32_0 = arith.constant 0 : i32
    %c0_i32_1 = arith.constant 0 : i32
    return %c0_i32, %c0_i32_0 : i32, i32
  }
  func.func @transform_6(%arg0: i32) -> (i32, i32) {
    %c0_i32 = arith.constant 0 : i32
    %c0_i32_0 = arith.constant 0 : i32
    %c0_i32_1 = arith.constant 0 : i32
    return %c0_i32, %c0_i32_0 : i32, i32
  }
  func.func @transform_7(%arg0: i32) -> (i32, i32) {
    %c0_i32 = arith.constant 0 : i32
    %c0_i32_0 = arith.constant 0 : i32
    %c0_i32_1 = arith.constant 0 : i32
    return %c0_i32, %c0_i32_0 : i32, i32
  }
  func.func @transform_8(%arg0: i32) -> (i32, i32) {
    %c0_i32 = arith.constant 0 : i32
    %c0_i32_0 = arith.constant 0 : i32
    %c0_i32_1 = arith.constant 0 : i32
    return %c0_i32, %c0_i32_0 : i32, i32
  }
  func.func @transform_9(%arg0: i32) -> (i32, i32) {
    %c0_i32 = arith.constant 0 : i32
    %c0_i32_0 = arith.constant 0 : i32
    return %arg0, %c0_i32 : i32, i32
  }
}

</mosaic_0001>

<llo_original>
// kernel: tpu_custom_call.1
$region0: #{tpu_custom_call.1}
  #allocation0 [shape = 'u32[]', space=smem, size = 0x4, offset = 0x4, fixed_abs, tag = 'smem constant byte address 0x4 - core index']
  #allocation1 [shape = 'u32[72,128]{1,0:T(1,128)}', space=vmem, size = 0x9000, scoped, tag = 'internal scratch']
  %s0 = inlined_call_operand.vmem [shape: f32[8,16], index: 0, kind: input, shape index: {}]
  %s1 = inlined_call_operand.vmem [shape: f32[8,4], index: 1, kind: input, shape index: {}]
  %s2 = inlined_call_operand.hbm [shape: f32[16,128], index: 2, kind: input, shape index: {}]
  %s3 = inlined_call_operand.vmem [shape: f32[4,128], index: 3, kind: input, shape index: {}]
  %s4 = inlined_call_operand.vmem [shape: f32[1,128], index: 4, kind: input, shape index: {}]
  %s5 = inlined_call_operand.hbm [shape: f32[128,128], index: 5, kind: input, shape index: {}]
  %s6 = inlined_call_operand.vmem [shape: f32[1,128], index: 6, kind: input, shape index: {}]
  %s7 = inlined_call_operand.hbm [shape: f32[128,128], index: 7, kind: input, shape index: {}]
  %s8 = inlined_call_operand.vmem [shape: f32[1,128], index: 8, kind: input, shape index: {}]
  %s9 = inlined_call_operand.hbm [shape: f32[8,128], index: 9, kind: output, shape index: {}]
  %s10 = sld [smem:[#allocation0]]
  $region58: #{tpu_custom_call.1} parent=0
    _
  %s12 = ssub.s32 1, %s10
  %s13 = scalar_select 0, %s12, %s10
  $region1: #{tpu_custom_call.1} parent=0
    #allocation2 [shape = 'u8[8192]{0}', space=vmem, size = 0x2000, scoped, tag = 'input window, operand 2, single buffered']
    #allocation3 [shape = 's32[1]{0}', space=sflag, size = 0x4, scoped, tag = 'scoped memory for tpu_custom_call.1']
    #allocation4 [shape = 's32[1]{0}', space=sflag, size = 0x4, scoped, tag = 'scoped memory for tpu_custom_call.1']
    #allocation5 [shape = 'u8[65536]{0}', space=vmem, size = 0x10000, scoped, tag = 'input window, operand 5, single buffered']
    #allocation6 [shape = 's32[1]{0}', space=sflag, size = 0x4, scoped, tag = 'scoped memory for tpu_custom_call.1']
    #allocation7 [shape = 'u8[65536]{0}', space=vmem, size = 0x10000, scoped, tag = 'input window, operand 7, single buffered']
    #allocation8 [shape = 'u8[4096]{0}', space=vmem, size = 0x1000, scoped, tag = 'output window, operand 0, single buffered']
    %14 = vsyncpa [#allocation3], 0
    %15 = vsyncpa [#allocation6], 0
    %16 = vsyncpa [#allocation4], 0
    // Predicated region
    $region2: #{tpu_custom_call.1} parent=1 // pred_check
      _
    $region3: #{tpu_custom_call.1} parent=1 // pred_check_branch
      %18 = sbr.rel (0) target = $region5
    $region4: #{tpu_custom_call.1} parent=1 // pred_region
      _
    $region5: #{tpu_custom_call.1} parent=1 // pred_fallthru
      _
    // Predicated region
    $region6: #{tpu_custom_call.1} parent=1 // pred_check
      _
    $region7: #{tpu_custom_call.1} parent=1 // pred_check_branch
      %20 = sbr.rel (0) target = $region9
    $region8: #{tpu_custom_call.1} parent=1 // pred_region
      _
    $region9: #{tpu_custom_call.1} parent=1 // pred_fallthru
      _
    // Predicated region
    $region10: #{tpu_custom_call.1} parent=1 // pred_check
      _
    $region11: #{tpu_custom_call.1} parent=1 // pred_check_branch
      %22 = sbr.rel (0) target = $region13
    $region12: #{tpu_custom_call.1} parent=1 // pred_region
      %24 = vsyncadd [#allocation3], 0
      %s25 = sshll.u32 %s2, 4
      %s26 = int_to_ptr.hbm [resolvable:$true] %s25
      %s27 = sshll.u32 [#allocation2], 4
      %s28 = int_to_ptr.vmem [resolvable:$true] %s27
      %33 = dma.hbm_to_vmem [thread:$0]  %s26, 256, %s28, [#allocation3], 128, 128, 8
    $region13: #{tpu_custom_call.1} parent=1 // pred_fallthru
      _
    // Predicated region
    $region14: #{tpu_custom_call.1} parent=1 // pred_check
      _
    $region15: #{tpu_custom_call.1} parent=1 // pred_check_branch
      %35 = sbr.rel (0) target = $region17
    $region16: #{tpu_custom_call.1} parent=1 // pred_region
      _
    $region17: #{tpu_custom_call.1} parent=1 // pred_fallthru
      _
    // Predicated region
    $region18: #{tpu_custom_call.1} parent=1 // pred_check
      _
    $region19: #{tpu_custom_call.1} parent=1 // pred_check_branch
      %37 = sbr.rel (0) target = $region21
    $region20: #{tpu_custom_call.1} parent=1 // pred_region
      _
    $region21: #{tpu_custom_call.1} parent=1 // pred_fallthru
      _
    // Predicated region
    $region22: #{tpu_custom_call.1} parent=1 // pred_check
      _
    $region23: #{tpu_custom_call.1} parent=1 // pred_check_branch
      %39 = sbr.rel (0) target = $region25
    $region24: #{tpu_custom_call.1} parent=1 // pred_region
      %41 = vsyncadd [#allocation6], 0
      %s42 = sshll.u32 %s5, 4
      %s43 = int_to_ptr.hbm [resolvable:$true] %s42
      %s44 = sshll.u32 [#allocation5], 4
      %s45 = int_to_ptr.vmem [resolvable:$true] %s44
      %50 = dma.hbm_to_vmem [thread:$0]  %s43, 2048, %s45, [#allocation6], 128, 128, 8
    $region25: #{tpu_custom_call.1} parent=1 // pred_fallthru
      _
    // Predicated region
    $region26: #{tpu_custom_call.1} parent=1 // pred_check
      _
    $region27: #{tpu_custom_call.1} parent=1 // pred_check_branch
      %52 = sbr.rel (0) target = $region29
    $region28: #{tpu_custom_call.1} parent=1 // pred_region
      _
    $region29: #{tpu_custom_call.1} parent=1 // pred_fallthru
      _
    // Predicated region
    $region30: #{tpu_custom_call.1} parent=1 // pred_check
      _
    $region31: #{tpu_custom_call.1} parent=1 // pred_check_branch
      %54 = sbr.rel (0) target = $region33
    $region32: #{tpu_custom_call.1} parent=1 // pred_region
      %56 = vsyncadd [#allocation6], 0
      %s57 = sshll.u32 %s7, 4
      %s58 = int_to_ptr.hbm [resolvable:$true] %s57
      %s59 = sshll.u32 [#allocation7], 4
      %s60 = int_to_ptr.vmem [resolvable:$true] %s59
      %65 = dma.hbm_to_vmem [thread:$0]  %s58, 2048, %s60, [#allocation6], 128, 128, 8
    $region33: #{tpu_custom_call.1} parent=1 // pred_fallthru
      _
    // Predicated region
    $region34: #{tpu_custom_call.1} parent=1 // pred_check
      _
    $region35: #{tpu_custom_call.1} parent=1 // pred_check_branch
      %67 = sbr.rel (0) target = $region37
    $region36: #{tpu_custom_call.1} parent=1 // pred_region
      _
    $region37: #{tpu_custom_call.1} parent=1 // pred_fallthru
      _
    // Predicated region
    $region38: #{tpu_custom_call.1} parent=1 // pred_check
      _
    $region39: #{tpu_custom_call.1} parent=1 // pred_check_branch
      %69 = sbr.rel (0) target = $region41
    $region40: #{tpu_custom_call.1} parent=1 // pred_region
      %71 = dma.done [#allocation3], 256
    $region41: #{tpu_custom_call.1} parent=1 // pred_fallthru
      _
    // Predicated region
    $region42: #{tpu_custom_call.1} parent=1 // pred_check
      _
    $region43: #{tpu_custom_call.1} parent=1 // pred_check_branch
      %73 = sbr.rel (0) target = $region45
    $region44: #{tpu_custom_call.1} parent=1 // pred_region
      %75 = dma.done [#allocation6], 2048
    $region45: #{tpu_custom_call.1} parent=1 // pred_fallthru
      _
    // Predicated region
    $region46: #{tpu_custom_call.1} parent=1 // pred_check
      _
    $region47: #{tpu_custom_call.1} parent=1 // pred_check_branch
      %77 = sbr.rel (0) target = $region49
    $region48: #{tpu_custom_call.1} parent=1 // pred_region
      %79 = dma.done [#allocation6], 2048
    $region49: #{tpu_custom_call.1} parent=1 // pred_fallthru
      _
    %v80 = vld [vmem:[%s0] sm:$0xff]
    %v81 = vld [vmem:[#allocation2] sm:$0xff]
    %v82 = vld [vmem:[#allocation2 + $0x8] sm:$0xff]
    %v83 = vld [vmem:[%s1] sm:$0xff]
    %v84 = vld [vmem:[%s3] sm:$0xf]
    %vm85 = vcmask 31744
    %v87 = vsel %vm85, %v83, 0
    %vm89 = vcmask 1043456
    %v91 = vsel %vm89, %v84, 0
    %93 = vmatpush.msra.mxu0 0.0
    %94 = vmatpush.msra.mxu0 0.0
    %95 = vmatpush.msra.mxu0 0.0
    %96 = vmatpush.msra.mxu0 0.0
    %97 = vmatpush.msra.mxu0 0.0
    %98 = vmatpush.msra.mxu0 0.0
    %99 = vmatpush.msra.mxu0 0.0
    %100 = vmatpush.msra.mxu0 0.0
    %101 = vmatpush.msra.mxu0 0.0
    %102 = vmatpush.msra.mxu0 0.0
    %103 = vmatpush.msra.mxu0 0.0
    %104 = vmatpush.msra.mxu0 0.0
    %105 = vmatpush.msra.mxu0 0.0
    %106 = vmatpush.msra.mxu0 0.0
    %107 = vmatpush.msra.mxu0 0.0
    %108 = vmatpush.msra.mxu0 %v91
    %109 = vmatmul.f32.gmra.mxu0 %v87
    %v110 = vpop.f32.mrf.mxu0
    %v111 = vadd.f32 0.0, %v110
    %112 = vdwg.mxu0
    %vm113 = vcmask 130048
    %v115 = vsel %vm113, %v80, 0
    %117 = vmatpush.msra.mxu0 0.0
    %118 = vmatpush.msra.mxu0 0.0
    %119 = vmatpush.msra.mxu0 0.0
    %120 = vmatpush.msra.mxu0 0.0
    %121 = vmatpush.msra.mxu0 0.0
    %122 = vmatpush.msra.mxu0 0.0
    %123 = vmatpush.msra.mxu0 0.0
    %124 = vmatpush.msra.mxu0 0.0
    %125 = vmatpush.msra.mxu0 0.0
    %126 = vmatpush.msra.mxu0 0.0
    %127 = vmatpush.msra.mxu0 0.0
    %128 = vmatpush.msra.mxu0 0.0
    %129 = vmatpush.msra.mxu0 0.0
    %130 = vmatpush.msra.mxu0 0.0
    %131 = vmatpush.msra.mxu0 %v82
    %132 = vmatpush.msra.mxu0 %v81
    %133 = vmatmul.f32.gmra.mxu0 %v115
    %v134 = vpop.f32.mrf.mxu0
    %v135 = vadd.f32 %v111, %v134
    %136 = vdwg.mxu0
    %v137 = vld [vmem:[%s4] sm:$0x1]
    %v139 = vperm.slane %v137, 0
    %v141 = vadd.f32 %v135, %v139
    %v142 = vmax.f32 %v141, 0.0
    %v143 = vld [vmem:[#allocation5] sm:$0xff]
    %v144 = vld [vmem:[#allocation5 + $0x8] sm:$0xff]
    %v145 = vld [vmem:[#allocation5 + $0x10] sm:$0xff]
    %v146 = vld [vmem:[#allocation5 + $0x18] sm:$0xff]
    %v147 = vld [vmem:[#allocation5 + $0x20] sm:$0xff]
    %v148 = vld [vmem:[#allocation5 + $0x28] sm:$0xff]
    %v149 = vld [vmem:[#allocation5 + $0x30] sm:$0xff]
    %v150 = vld [vmem:[#allocation5 + $0x38] sm:$0xff]
    %v151 = vld [vmem:[#allocation5 + $0x40] sm:$0xff]
    %v152 = vld [vmem:[#allocation5 + $0x48] sm:$0xff]
    %v153 = vld [vmem:[#allocation5 + $0x50] sm:$0xff]
    %v154 = vld [vmem:[#allocation5 + $0x58] sm:$0xff]
    %v155 = vld [vmem:[#allocation5 + $0x60] sm:$0xff]
    %v156 = vld [vmem:[#allocation5 + $0x68] sm:$0xff]
    %v157 = vld [vmem:[#allocation5 + $0x70] sm:$0xff]
    %v158 = vld [vmem:[#allocation5 + $0x78] sm:$0xff]
    %v159 = vld [vmem:[%s6] sm:$0x1]
    %v161 = vperm.slane %v159, 0
    %163 = vmatpush.msra.mxu0 %v158
    %164 = vmatpush.msra.mxu0 %v157
    %165 = vmatpush.msra.mxu0 %v156
    %166 = vmatpush.msra.mxu0 %v155
    %167 = vmatpush.msra.mxu0 %v154
    %168 = vmatpush.msra.mxu0 %v153
    %169 = vmatpush.msra.mxu0 %v152
    %170 = vmatpush.msra.mxu0 %v151
    %171 = vmatpush.msra.mxu0 %v150
    %172 = vmatpush.msra.mxu0 %v149
    %173 = vmatpush.msra.mxu0 %v148
    %174 = vmatpush.msra.mxu0 %v147
    %175 = vmatpush.msra.mxu0 %v146
    %176 = vmatpush.msra.mxu0 %v145
    %177 = vmatpush.msra.mxu0 %v144
    %178 = vmatpush.msra.mxu0 %v143
    %179 = vmatmul.f32.gmra.mxu0 %v142
    %v180 = vpop.f32.mrf.mxu0
    %v181 = vadd.f32 %v161, %v180
    %182 = vdwg.mxu0
    %v183 = vmax.f32 %v181, 0.0
    %v184 = vld [vmem:[#allocation7] sm:$0xff]
    %v185 = vld [vmem:[#allocation7 + $0x8] sm:$0xff]
    %v186 = vld [vmem:[#allocation7 + $0x10] sm:$0xff]
    %v187 = vld [vmem:[#allocation7 + $0x18] sm:$0xff]
    %v188 = vld [vmem:[#allocation7 + $0x20] sm:$0xff]
    %v189 = vld [vmem:[#allocation7 + $0x28] sm:$0xff]
    %v190 = vld [vmem:[#allocation7 + $0x30] sm:$0xff]
    %v191 = vld [vmem:[#allocation7 + $0x38] sm:$0xff]
    %v192 = vld [vmem:[#allocation7 + $0x40] sm:$0xff]
    %v193 = vld [vmem:[#allocation7 + $0x48] sm:$0xff]
    %v194 = vld [vmem:[#allocation7 + $0x50] sm:$0xff]
    %v195 = vld [vmem:[#allocation7 + $0x58] sm:$0xff]
    %v196 = vld [vmem:[#allocation7 + $0x60] sm:$0xff]
    %v197 = vld [vmem:[#allocation7 + $0x68] sm:$0xff]
    %v198 = vld [vmem:[#allocation7 + $0x70] sm:$0xff]
    %v199 = vld [vmem:[#allocation7 + $0x78] sm:$0xff]
    %v200 = vld [vmem:[%s8] sm:$0x1]
    %v202 = vperm.slane %v200, 0
    %204 = vmatpush.msra.mxu0 %v199
    %205 = vmatpush.msra.mxu0 %v198
    %206 = vmatpush.msra.mxu0 %v197
    %207 = vmatpush.msra.mxu0 %v196
    %208 = vmatpush.msra.mxu0 %v195
    %209 = vmatpush.msra.mxu0 %v194
    %210 = vmatpush.msra.mxu0 %v193
    %211 = vmatpush.msra.mxu0 %v192
    %212 = vmatpush.msra.mxu0 %v191
    %213 = vmatpush.msra.mxu0 %v190
    %214 = vmatpush.msra.mxu0 %v189
    %215 = vmatpush.msra.mxu0 %v188
    %216 = vmatpush.msra.mxu0 %v187
    %217 = vmatpush.msra.mxu0 %v186
    %218 = vmatpush.msra.mxu0 %v185
    %219 = vmatpush.msra.mxu0 %v184
    %220 = vmatmul.f32.gmra.mxu0 %v183
    %v221 = vpop.f32.mrf.mxu0
    %v222 = vadd.f32 %v202, %v221
    %223 = vdwg.mxu0
    %224 = vst [vmem:[#allocation8] sm:$0xff] %v222
    // Predicated region
    $region50: #{tpu_custom_call.1} parent=1 // pred_check
      _
    $region51: #{tpu_custom_call.1} parent=1 // pred_check_branch
      %226 = sbr.rel (0) target = $region53
    $region52: #{tpu_custom_call.1} parent=1 // pred_region
      %228 = vsyncadd [#allocation4], 0
      %s230 = sshll.u32 [#allocation8], 4
      %s231 = int_to_ptr.vmem [resolvable:$true] %s230
      %s232 = sshll.u32 %s9, 4
      %s233 = int_to_ptr.hbm [resolvable:$true] %s232
      %235 = dma.vmem_to_hbm [thread:$0]  %s231, 128, %s233, [#allocation4]
    $region53: #{tpu_custom_call.1} parent=1 // pred_fallthru
      _
    // Predicated region
    $region54: #{tpu_custom_call.1} parent=1 // pred_check
      _
    $region55: #{tpu_custom_call.1} parent=1 // pred_check_branch
      %237 = sbr.rel (0) target = $region57
    $region56: #{tpu_custom_call.1} parent=1 // pred_region
      %239 = dma.done [#allocation4], 128
    $region57: #{tpu_custom_call.1} parent=1 // pred_fallthru
      _
    %240 = vsyncpa [#allocation3], 1
    %241 = vsyncpa [#allocation6], 1
    %242 = vsyncpa [#allocation4], 1

</llo_original>
